<compile_context>
chip_gen: v7x
topology: tpu7x:2x2x1
jax: 0.10.0
libtpu: 0.0.40
codegen_flags: <defaults>
</compile_context>

<pallas_src>
import math

import jax
import jax.numpy as jnp
from jax.experimental import pallas as pl
from jax.experimental.pallas import tpu as pltpu


def _make_fused_kernel(kernel_shapes):
    """Kernel for a fixed (static) chain of (KH, KW) all-ones valid convs."""

    def kernel(bias_ref, x_ref, o_ref):
        # bias_ref: (1,) f32 in SMEM  -- pre-folded total bias offset
        # x_ref:    (H, W, BT) f32 in VMEM   (batch on the lane axis)
        # o_ref:    (OH, OW, BT) f32 in VMEM
        cur = x_ref[...]
        h, w = cur.shape[0], cur.shape[1]
        for kh, kw in kernel_shapes:
            oh, ow = h - kh + 1, w - kw + 1
            # Row (H, major-dim) shift-adds: KH slices.
            acc = cur[0:oh, :, :]
            for i in range(1, kh):
                acc = acc + cur[i:i + oh, :, :]
            # Column (W, sublane) shift-adds on the partial sum: KW slices.
            out = acc[:, 0:ow, :]
            for j in range(1, kw):
                out = out + acc[:, j:j + ow, :]
            cur = out
            h, w = oh, ow
        # Single bias add at the very end (all per-layer biases folded in).
        o_ref[...] = cur + bias_ref[0]

    return kernel


def fused_simpleconv_pallas(x_hwn, kernel_shapes, bias_total):
    """Run the whole conv chain in one pallas_call.

    x_hwn:         (H, W, N) float32, batch last (lane axis)
    kernel_shapes: tuple of (KH, KW)
    bias_total:    (1,) float32, pre-folded bias offset
    returns        (OH, OW, N) float32
    """
    H, W, N = x_hwn.shape
    OH, OW = H, W
    for kh, kw in kernel_shapes:
        OH, OW = OH - kh + 1, OW - kw + 1

    # Batch tiling: one tile for small N, 128-wide lane-dense tiles otherwise.
    if N >= 128:
        b_tile = 128
        n_pad = -(-N // 128) * 128
    else:
        b_tile = N
        n_pad = N
    if n_pad != N:
        x_hwn = jnp.pad(x_hwn, ((0, 0), (0, 0), (0, n_pad - N)))
    num_tiles = n_pad // b_tile

    out = pl.pallas_call(
        _make_fused_kernel(kernel_shapes),
        out_shape=jax.ShapeDtypeStruct((OH, OW, n_pad), jnp.float32),
        grid=(num_tiles,),
        in_specs=[
            pl.BlockSpec(memory_space=pltpu.MemorySpace.SMEM),   # bias_total
            pl.BlockSpec((H, W, b_tile), lambda b: (0, 0, b)),   # batch tile
        ],
        out_specs=pl.BlockSpec((OH, OW, b_tile), lambda b: (0, 0, b)),
        compiler_params=pltpu.CompilerParams(
            dimension_semantics=("parallel",)),
    )(bias_total, x_hwn)
    return out[:, :, :N]


class SimpleConvPallas:
    """JAX/Pallas equivalent of the PyTorch SimpleConv module."""

    def __init__(self, kernel_sizes, key):
        # kernel_sizes entries are (C, KH, KW); the conv uses KH, KW.
        self.kernel_shapes = tuple((int(ks[1]), int(ks[2])) for ks in kernel_sizes)
        self.biases = []
        for kh, kw in self.kernel_shapes:
            # Conv weight is forced to all-ones in the PyTorch module (static).
            # Bias keeps PyTorch's default init U(-1/sqrt(fan_in), 1/sqrt(fan_in)),
            # reproduced deterministically from the provided key.
            key, sub = jax.random.split(key)
            bound = 1.0 / math.sqrt(1 * kh * kw)
            b = jax.random.uniform(sub, (1,), minval=-bound, maxval=bound,
                                   dtype=jnp.float32)
            self.biases.append(b)

        # Fold all per-layer biases into one scalar added after the last conv:
        # conv_ones(y + c) == conv_ones(y) + c * KH * KW, so
        #   total = (((b0 * A1) + b1) * A2 + b2) ...   with A_i = KH_i * KW_i.
        total = jnp.zeros((1,), jnp.float32)
        for (kh, kw), b in zip(self.kernel_shapes, self.biases):
            total = total * float(kh * kw) + b
        self.bias_total = total

    def __call__(self, x):
        # x: (N, 1, H, W) NCHW with a single channel.
        x_hwn = jnp.transpose(x[:, 0, :, :], (1, 2, 0)).astype(jnp.float32)
        y = fused_simpleconv_pallas(x_hwn, self.kernel_shapes, self.bias_total)
        # (OH, OW, N) -> (N, 1, OH, OW)
        return jnp.transpose(y, (2, 0, 1))[:, None, :, :]


def _reference_forward(x, kernel_shapes, biases):
    """Pure-JAX reference: per-layer lax.conv (NCHW) with per-layer bias."""
    y = x.astype(jnp.float32)
    for (kh, kw), b in zip(kernel_shapes, biases):
        w = jnp.ones((1, 1, kh, kw), jnp.float32)
        y = jax.lax.conv_general_dilated(
            y, w, window_strides=(1, 1), padding="VALID",
            dimension_numbers=("NCHW", "OIHW", "NCHW"),
        ) + b[0]
    return y


if __name__ == "__main__":
    # kernel_sizes as (C, KH, KW) tuples -> Conv2d(1, 1, (KH, KW)) each.
    kernel_sizes = [(1, 3, 3), (1, 5, 5)]

    key = jax.random.PRNGKey(0)
    key, xkey, pkey = jax.random.split(key, 3)

    # Input: NCHW with a single channel.
    x = jax.random.normal(xkey, (2, 1, 16, 16), dtype=jnp.float32)

    model = SimpleConvPallas(kernel_sizes, pkey)
    out = jax.block_until_ready(model(x))

    # Sanity check against a pure-JAX reference.
    ref = jax.block_until_ready(
        _reference_forward(x, model.kernel_shapes, model.biases))
    assert out.shape == ref.shape == (2, 1, 10, 10), (out.shape, ref.shape)
    assert jnp.allclose(out, ref, atol=1e-4, rtol=1e-4), "mismatch vs reference"

    print("KERNEL_OK")
</pallas_src>

<mosaic_0001>
module attributes {stable_mosaic.version = 11 : i64} {
  func.func @kernel(%arg0: i32, %arg1: memref<1xf32, #tpu.memory_space<smem>>, %arg2: memref<16x16x2xf32, #tpu.memory_space<vmem>>, %arg3: memref<10x10x2xf32, #tpu.memory_space<vmem>>) attributes {dimension_semantics = [#tpu.dimension_semantics<parallel>], iteration_bounds = array<i64: 1>, scalar_prefetch = 0 : i64, scratch_operands = 0 : i64, tpu.core_type = #tpu.core_type<tc>, window_params = [{transform_indices = @transform_0, window_bounds = array<i64: 1>}, {transform_indices = @transform_1, window_bounds = array<i64: 16, 16, 2>}, {transform_indices = @transform_2, window_bounds = array<i64: 10, 10, 2>}]} {
    %c0 = arith.constant 0 : index
    %c0_0 = arith.constant 0 : index
    %c0_1 = arith.constant 0 : index
    %0 = vector.load %arg2[%c0, %c0_0, %c0_1] : memref<16x16x2xf32, #tpu.memory_space<vmem>>, vector<16x16x2xf32>
    %1 = vector.extract_strided_slice %0 {offsets = [0, 0, 0], sizes = [14, 16, 2], strides = [1, 1, 1]} : vector<16x16x2xf32> to vector<14x16x2xf32>
    %2 = vector.extract_strided_slice %0 {offsets = [1, 0, 0], sizes = [14, 16, 2], strides = [1, 1, 1]} : vector<16x16x2xf32> to vector<14x16x2xf32>
    %3 = arith.addf %1, %2 : vector<14x16x2xf32>
    %4 = vector.extract_strided_slice %0 {offsets = [2, 0, 0], sizes = [14, 16, 2], strides = [1, 1, 1]} : vector<16x16x2xf32> to vector<14x16x2xf32>
    %5 = arith.addf %3, %4 : vector<14x16x2xf32>
    %6 = vector.extract_strided_slice %5 {offsets = [0, 0, 0], sizes = [14, 14, 2], strides = [1, 1, 1]} : vector<14x16x2xf32> to vector<14x14x2xf32>
    %7 = vector.extract_strided_slice %5 {offsets = [0, 1, 0], sizes = [14, 14, 2], strides = [1, 1, 1]} : vector<14x16x2xf32> to vector<14x14x2xf32>
    %8 = arith.addf %6, %7 : vector<14x14x2xf32>
    %9 = vector.extract_strided_slice %5 {offsets = [0, 2, 0], sizes = [14, 14, 2], strides = [1, 1, 1]} : vector<14x16x2xf32> to vector<14x14x2xf32>
    %10 = arith.addf %8, %9 : vector<14x14x2xf32>
    %11 = vector.extract_strided_slice %10 {offsets = [0, 0, 0], sizes = [10, 14, 2], strides = [1, 1, 1]} : vector<14x14x2xf32> to vector<10x14x2xf32>
    %12 = vector.extract_strided_slice %10 {offsets = [1, 0, 0], sizes = [10, 14, 2], strides = [1, 1, 1]} : vector<14x14x2xf32> to vector<10x14x2xf32>
    %13 = arith.addf %11, %12 : vector<10x14x2xf32>
    %14 = vector.extract_strided_slice %10 {offsets = [2, 0, 0], sizes = [10, 14, 2], strides = [1, 1, 1]} : vector<14x14x2xf32> to vector<10x14x2xf32>
    %15 = arith.addf %13, %14 : vector<10x14x2xf32>
    %16 = vector.extract_strided_slice %10 {offsets = [3, 0, 0], sizes = [10, 14, 2], strides = [1, 1, 1]} : vector<14x14x2xf32> to vector<10x14x2xf32>
    %17 = arith.addf %15, %16 : vector<10x14x2xf32>
    %18 = vector.extract_strided_slice %10 {offsets = [4, 0, 0], sizes = [10, 14, 2], strides = [1, 1, 1]} : vector<14x14x2xf32> to vector<10x14x2xf32>
    %19 = arith.addf %17, %18 : vector<10x14x2xf32>
    %20 = vector.extract_strided_slice %19 {offsets = [0, 0, 0], sizes = [10, 10, 2], strides = [1, 1, 1]} : vector<10x14x2xf32> to vector<10x10x2xf32>
    %21 = vector.extract_strided_slice %19 {offsets = [0, 1, 0], sizes = [10, 10, 2], strides = [1, 1, 1]} : vector<10x14x2xf32> to vector<10x10x2xf32>
    %22 = arith.addf %20, %21 : vector<10x10x2xf32>
    %23 = vector.extract_strided_slice %19 {offsets = [0, 2, 0], sizes = [10, 10, 2], strides = [1, 1, 1]} : vector<10x14x2xf32> to vector<10x10x2xf32>
    %24 = arith.addf %22, %23 : vector<10x10x2xf32>
    %25 = vector.extract_strided_slice %19 {offsets = [0, 3, 0], sizes = [10, 10, 2], strides = [1, 1, 1]} : vector<10x14x2xf32> to vector<10x10x2xf32>
    %26 = arith.addf %24, %25 : vector<10x10x2xf32>
    %27 = vector.extract_strided_slice %19 {offsets = [0, 4, 0], sizes = [10, 10, 2], strides = [1, 1, 1]} : vector<10x14x2xf32> to vector<10x10x2xf32>
    %28 = arith.addf %26, %27 : vector<10x10x2xf32>
    %c0_2 = arith.constant 0 : index
    %29 = memref.load %arg1[%c0_2] : memref<1xf32, #tpu.memory_space<smem>>
    %30 = vector.broadcast %29 : f32 to vector<10x10x2xf32>
    %31 = arith.addf %28, %30 : vector<10x10x2xf32>
    %c0_3 = arith.constant 0 : index
    %c0_4 = arith.constant 0 : index
    %c0_5 = arith.constant 0 : index
    %32 = vector.load %arg3[%c0_3, %c0_4, %c0_5] : memref<10x10x2xf32, #tpu.memory_space<vmem>>, vector<10x10x2xf32>
    tpu.vector_store %arg3[%c0_3, %c0_4, %c0_5], %31 {strides = array<i32>} : memref<10x10x2xf32, #tpu.memory_space<vmem>>, vector<10x10x2xf32>,
    return
  }
  func.func @transform_0(%arg0: i32) -> i32 {
    %c0_i32 = arith.constant 0 : i32
    %c0_i32_0 = arith.constant 0 : i32
    return %c0_i32 : i32
  }
  func.func @transform_1(%arg0: i32) -> (i32, i32, i32) {
    %c0_i32 = arith.constant 0 : i32
    %c0_i32_0 = arith.constant 0 : i32
    %c0_i32_1 = arith.constant 0 : i32
    return %c0_i32, %c0_i32_0, %arg0 : i32, i32, i32
  }
  func.func @transform_2(%arg0: i32) -> (i32, i32, i32) {
    %c0_i32 = arith.constant 0 : i32
    %c0_i32_0 = arith.constant 0 : i32
    %c0_i32_1 = arith.constant 0 : i32
    return %c0_i32, %c0_i32_0, %arg0 : i32, i32, i32
  }
}

</mosaic_0001>

<llo_original>
// kernel: tpu_custom_call.1
$region0: #{tpu_custom_call.1}
  #allocation0 [shape = 'u32[]', space=smem, size = 0x4, offset = 0x4, fixed_abs, tag = 'smem constant byte address 0x4 - core index']
  #allocation1 [shape = 'u32[144,128]{1,0:T(1,128)}', space=vmem, size = 0x12000, scoped, tag = 'internal scratch']
  #allocation2 [shape = 'f32[1]{0:T(128)S(6)}', space=smem, size = 0x200, scoped, tag = 'scoped memory for tpu_custom_call.1']
  %s0 = inlined_call_operand.<no memory space> [shape: f32[1], index: 0, kind: input, shape index: {}]
  %s1 = inlined_call_operand.vmem [shape: f32[16,16,2], index: 1, kind: input, shape index: {}]
  %s2 = inlined_call_operand.vmem [shape: f32[10,10,2], index: 2, kind: output, shape index: {}]
  %s3 = sld [smem:[#allocation0]]
  $region18: #{tpu_custom_call.1} parent=0
    _
  %s5 = ssub.s32 1, %s3
  %s6 = scalar_select 0, %s5, %s3
  %7 = sst [smem:[#allocation2]] %s0
  // Predicated region
  $region2: #{tpu_custom_call.1} parent=0 // pred_check
    _
  $region3: #{tpu_custom_call.1} parent=0 // pred_check_branch
    %9 = sbr.rel (0) target = $region5
  $region4: #{tpu_custom_call.1} parent=0 // pred_region
    _
  $region5: #{tpu_custom_call.1} parent=0 // pred_fallthru
    _
  // Predicated region
  $region6: #{tpu_custom_call.1} parent=0 // pred_check
    _
  $region7: #{tpu_custom_call.1} parent=0 // pred_check_branch
    %11 = sbr.rel (0) target = $region9
  $region8: #{tpu_custom_call.1} parent=0 // pred_region
    _
  $region9: #{tpu_custom_call.1} parent=0 // pred_fallthru
    _
  %v12 = vld [vmem:[%s1] sm:$0xff]
  %v13 = vld [vmem:[%s1 + $0x8] sm:$0xff]
  %v14 = vld [vmem:[%s1 + $0x10] sm:$0xff]
  %v15 = vld [vmem:[%s1 + $0x18] sm:$0xff]
  %v16 = vld [vmem:[%s1 + $0x20] sm:$0xff]
  %v17 = vld [vmem:[%s1 + $0x28] sm:$0xff]
  %v18 = vld [vmem:[%s1 + $0x30] sm:$0xff]
  %v19 = vld [vmem:[%s1 + $0x38] sm:$0xff]
  %v20 = vld [vmem:[%s1 + $0x40] sm:$0xff]
  %v21 = vld [vmem:[%s1 + $0x48] sm:$0xff]
  %v22 = vld [vmem:[%s1 + $0x50] sm:$0xff]
  %v23 = vld [vmem:[%s1 + $0x58] sm:$0xff]
  %v24 = vld [vmem:[%s1 + $0x60] sm:$0xff]
  %v25 = vld [vmem:[%s1 + $0x68] sm:$0xff]
  %v26 = vld [vmem:[%s1 + $0x70] sm:$0xff]
  %v27 = vld [vmem:[%s1 + $0x78] sm:$0xff]
  %v28 = vld [vmem:[%s1 + $0x80] sm:$0xff]
  %v29 = vld [vmem:[%s1 + $0x88] sm:$0xff]
  %v30 = vld [vmem:[%s1 + $0x90] sm:$0xff]
  %v31 = vld [vmem:[%s1 + $0x98] sm:$0xff]
  %v32 = vld [vmem:[%s1 + $0xa0] sm:$0xff]
  %v33 = vld [vmem:[%s1 + $0xa8] sm:$0xff]
  %v34 = vld [vmem:[%s1 + $0xb0] sm:$0xff]
  %v35 = vld [vmem:[%s1 + $0xb8] sm:$0xff]
  %v36 = vld [vmem:[%s1 + $0xc0] sm:$0xff]
  %v37 = vld [vmem:[%s1 + $0xc8] sm:$0xff]
  %v38 = vld [vmem:[%s1 + $0xd0] sm:$0xff]
  %v39 = vld [vmem:[%s1 + $0xd8] sm:$0xff]
  %v40 = vld [vmem:[%s1 + $0xe0] sm:$0xff]
  %v41 = vld [vmem:[%s1 + $0xe8] sm:$0xff]
  %v42 = vld [vmem:[%s1 + $0xf0] sm:$0xff]
  %v43 = vld [vmem:[%s1 + $0xf8] sm:$0xff]
  %v44 = vadd.f32 %v12, %v14
  %v45 = vadd.f32 %v13, %v15
  %v46 = vadd.f32 %v14, %v16
  %v47 = vadd.f32 %v15, %v17
  %v48 = vadd.f32 %v16, %v18
  %v49 = vadd.f32 %v17, %v19
  %v50 = vadd.f32 %v18, %v20
  %v51 = vadd.f32 %v19, %v21
  %v52 = vadd.f32 %v20, %v22
  %v53 = vadd.f32 %v21, %v23
  %v54 = vadd.f32 %v22, %v24
  %v55 = vadd.f32 %v23, %v25
  %v56 = vadd.f32 %v24, %v26
  %v57 = vadd.f32 %v25, %v27
  %v58 = vadd.f32 %v26, %v28
  %v59 = vadd.f32 %v27, %v29
  %v60 = vadd.f32 %v28, %v30
  %v61 = vadd.f32 %v29, %v31
  %v62 = vadd.f32 %v30, %v32
  %v63 = vadd.f32 %v31, %v33
  %v64 = vadd.f32 %v32, %v34
  %v65 = vadd.f32 %v33, %v35
  %v66 = vadd.f32 %v34, %v36
  %v67 = vadd.f32 %v35, %v37
  %v68 = vadd.f32 %v36, %v38
  %v69 = vadd.f32 %v37, %v39
  %v70 = vadd.f32 %v38, %v40
  %v71 = vadd.f32 %v39, %v41
  %v72 = vadd.f32 %v44, %v16
  %v73 = vadd.f32 %v45, %v17
  %v74 = vadd.f32 %v46, %v18
  %v75 = vadd.f32 %v47, %v19
  %v76 = vadd.f32 %v48, %v20
  %v77 = vadd.f32 %v49, %v21
  %v78 = vadd.f32 %v50, %v22
  %v79 = vadd.f32 %v51, %v23
  %v80 = vadd.f32 %v52, %v24
  %v81 = vadd.f32 %v53, %v25
  %v82 = vadd.f32 %v54, %v26
  %v83 = vadd.f32 %v55, %v27
  %v84 = vadd.f32 %v56, %v28
  %v85 = vadd.f32 %v57, %v29
  %v86 = vadd.f32 %v58, %v30
  %v87 = vadd.f32 %v59, %v31
  %v88 = vadd.f32 %v60, %v32
  %v89 = vadd.f32 %v61, %v33
  %v90 = vadd.f32 %v62, %v34
  %v91 = vadd.f32 %v63, %v35
  %v92 = vadd.f32 %v64, %v36
  %v93 = vadd.f32 %v65, %v37
  %v94 = vadd.f32 %v66, %v38
  %v95 = vadd.f32 %v67, %v39
  %v96 = vadd.f32 %v68, %v40
  %v97 = vadd.f32 %v69, %v41
  %v98 = vadd.f32 %v70, %v42
  %v99 = vadd.f32 %v71, %v43
  %vm128 = vcmask 1046528
  %v129 = vrot.slane %v72, 1
  %v130 = vrot.slane %v73, 1
  %v131 = vsel %vm128, %v129, %v130
  %v132 = vrot.slane %v74, 1
  %v133 = vrot.slane %v75, 1
  %v134 = vsel %vm128, %v132, %v133
  %v135 = vrot.slane %v76, 1
  %v136 = vrot.slane %v77, 1
  %v137 = vsel %vm128, %v135, %v136
  %v138 = vrot.slane %v78, 1
  %v139 = vrot.slane %v79, 1
  %v140 = vsel %vm128, %v138, %v139
  %v141 = vrot.slane %v80, 1
  %v142 = vrot.slane %v81, 1
  %v143 = vsel %vm128, %v141, %v142
  %v144 = vrot.slane %v82, 1
  %v145 = vrot.slane %v83, 1
  %v146 = vsel %vm128, %v144, %v145
  %v147 = vrot.slane %v84, 1
  %v148 = vrot.slane %v85, 1
  %v149 = vsel %vm128, %v147, %v148
  %v150 = vrot.slane %v86, 1
  %v151 = vrot.slane %v87, 1
  %v152 = vsel %vm128, %v150, %v151
  %v153 = vrot.slane %v88, 1
  %v154 = vrot.slane %v89, 1
  %v155 = vsel %vm128, %v153, %v154
  %v156 = vrot.slane %v90, 1
  %v157 = vrot.slane %v91, 1
  %v158 = vsel %vm128, %v156, %v157
  %v159 = vrot.slane %v92, 1
  %v160 = vrot.slane %v93, 1
  %v161 = vsel %vm128, %v159, %v160
  %v162 = vrot.slane %v94, 1
  %v163 = vrot.slane %v95, 1
  %v164 = vsel %vm128, %v162, %v163
  %v165 = vrot.slane %v96, 1
  %v166 = vrot.slane %v97, 1
  %v167 = vsel %vm128, %v165, %v166
  %v168 = vrot.slane %v98, 1
  %v169 = vrot.slane %v99, 1
  %v170 = vsel %vm128, %v168, %v169
  %v199 = vadd.f32 %v72, %v131
  %v200 = vadd.f32 %v73, %v130
  %v201 = vadd.f32 %v74, %v134
  %v202 = vadd.f32 %v75, %v133
  %v203 = vadd.f32 %v76, %v137
  %v204 = vadd.f32 %v77, %v136
  %v205 = vadd.f32 %v78, %v140
  %v206 = vadd.f32 %v79, %v139
  %v207 = vadd.f32 %v80, %v143
  %v208 = vadd.f32 %v81, %v142
  %v209 = vadd.f32 %v82, %v146
  %v210 = vadd.f32 %v83, %v145
  %v211 = vadd.f32 %v84, %v149
  %v212 = vadd.f32 %v85, %v148
  %v213 = vadd.f32 %v86, %v152
  %v214 = vadd.f32 %v87, %v151
  %v215 = vadd.f32 %v88, %v155
  %v216 = vadd.f32 %v89, %v154
  %v217 = vadd.f32 %v90, %v158
  %v218 = vadd.f32 %v91, %v157
  %v219 = vadd.f32 %v92, %v161
  %v220 = vadd.f32 %v93, %v160
  %v221 = vadd.f32 %v94, %v164
  %v222 = vadd.f32 %v95, %v163
  %v223 = vadd.f32 %v96, %v167
  %v224 = vadd.f32 %v97, %v166
  %v225 = vadd.f32 %v98, %v170
  %v226 = vadd.f32 %v99, %v169
  %vm227 = vcmask 1045504
  %v228 = vrot.slane %v72, 2
  %v229 = vrot.slane %v73, 2
  %v230 = vsel %vm227, %v228, %v229
  %v231 = vrot.slane %v74, 2
  %v232 = vrot.slane %v75, 2
  %v233 = vsel %vm227, %v231, %v232
  %v234 = vrot.slane %v76, 2
  %v235 = vrot.slane %v77, 2
  %v236 = vsel %vm227, %v234, %v235
  %v237 = vrot.slane %v78, 2
  %v238 = vrot.slane %v79, 2
  %v239 = vsel %vm227, %v237, %v238
  %v240 = vrot.slane %v80, 2
  %v241 = vrot.slane %v81, 2
  %v242 = vsel %vm227, %v240, %v241
  %v243 = vrot.slane %v82, 2
  %v244 = vrot.slane %v83, 2
  %v245 = vsel %vm227, %v243, %v244
  %v246 = vrot.slane %v84, 2
  %v247 = vrot.slane %v85, 2
  %v248 = vsel %vm227, %v246, %v247
  %v249 = vrot.slane %v86, 2
  %v250 = vrot.slane %v87, 2
  %v251 = vsel %vm227, %v249, %v250
  %v252 = vrot.slane %v88, 2
  %v253 = vrot.slane %v89, 2
  %v254 = vsel %vm227, %v252, %v253
  %v255 = vrot.slane %v90, 2
  %v256 = vrot.slane %v91, 2
  %v257 = vsel %vm227, %v255, %v256
  %v258 = vrot.slane %v92, 2
  %v259 = vrot.slane %v93, 2
  %v260 = vsel %vm227, %v258, %v259
  %v261 = vrot.slane %v94, 2
  %v262 = vrot.slane %v95, 2
  %v263 = vsel %vm227, %v261, %v262
  %v264 = vrot.slane %v96, 2
  %v265 = vrot.slane %v97, 2
  %v266 = vsel %vm227, %v264, %v265
  %v267 = vrot.slane %v98, 2
  %v268 = vrot.slane %v99, 2
  %v269 = vsel %vm227, %v267, %v268
  %v298 = vadd.f32 %v199, %v230
  %v299 = vadd.f32 %v200, %v229
  %v300 = vadd.f32 %v201, %v233
  %v301 = vadd.f32 %v202, %v232
  %v302 = vadd.f32 %v203, %v236
  %v303 = vadd.f32 %v204, %v235
  %v304 = vadd.f32 %v205, %v239
  %v305 = vadd.f32 %v206, %v238
  %v306 = vadd.f32 %v207, %v242
  %v307 = vadd.f32 %v208, %v241
  %v308 = vadd.f32 %v209, %v245
  %v309 = vadd.f32 %v210, %v244
  %v310 = vadd.f32 %v211, %v248
  %v311 = vadd.f32 %v212, %v247
  %v312 = vadd.f32 %v213, %v251
  %v313 = vadd.f32 %v214, %v250
  %v314 = vadd.f32 %v215, %v254
  %v315 = vadd.f32 %v216, %v253
  %v316 = vadd.f32 %v217, %v257
  %v317 = vadd.f32 %v218, %v256
  %v318 = vadd.f32 %v219, %v260
  %v319 = vadd.f32 %v220, %v259
  %v320 = vadd.f32 %v221, %v263
  %v321 = vadd.f32 %v222, %v262
  %v322 = vadd.f32 %v223, %v266
  %v323 = vadd.f32 %v224, %v265
  %v324 = vadd.f32 %v225, %v269
  %v325 = vadd.f32 %v226, %v268
  %v326 = vadd.f32 %v298, %v300
  %v327 = vadd.f32 %v299, %v301
  %v328 = vadd.f32 %v300, %v302
  %v329 = vadd.f32 %v301, %v303
  %v330 = vadd.f32 %v302, %v304
  %v331 = vadd.f32 %v303, %v305
  %v332 = vadd.f32 %v304, %v306
  %v333 = vadd.f32 %v305, %v307
  %v334 = vadd.f32 %v306, %v308
  %v335 = vadd.f32 %v307, %v309
  %v336 = vadd.f32 %v308, %v310
  %v337 = vadd.f32 %v309, %v311
  %v338 = vadd.f32 %v310, %v312
  %v339 = vadd.f32 %v311, %v313
  %v340 = vadd.f32 %v312, %v314
  %v341 = vadd.f32 %v313, %v315
  %v342 = vadd.f32 %v314, %v316
  %v343 = vadd.f32 %v315, %v317
  %v344 = vadd.f32 %v316, %v318
  %v345 = vadd.f32 %v317, %v319
  %v346 = vadd.f32 %v326, %v302
  %v347 = vadd.f32 %v327, %v303
  %v348 = vadd.f32 %v328, %v304
  %v349 = vadd.f32 %v329, %v305
  %v350 = vadd.f32 %v330, %v306
  %v351 = vadd.f32 %v331, %v307
  %v352 = vadd.f32 %v332, %v308
  %v353 = vadd.f32 %v333, %v309
  %v354 = vadd.f32 %v334, %v310
  %v355 = vadd.f32 %v335, %v311
  %v356 = vadd.f32 %v336, %v312
  %v357 = vadd.f32 %v337, %v313
  %v358 = vadd.f32 %v338, %v314
  %v359 = vadd.f32 %v339, %v315
  %v360 = vadd.f32 %v340, %v316
  %v361 = vadd.f32 %v341, %v317
  %v362 = vadd.f32 %v342, %v318
  %v363 = vadd.f32 %v343, %v319
  %v364 = vadd.f32 %v344, %v320
  %v365 = vadd.f32 %v345, %v321
  %v366 = vadd.f32 %v346, %v304
  %v367 = vadd.f32 %v347, %v305
  %v368 = vadd.f32 %v348, %v306
  %v369 = vadd.f32 %v349, %v307
  %v370 = vadd.f32 %v350, %v308
  %v371 = vadd.f32 %v351, %v309
  %v372 = vadd.f32 %v352, %v310
  %v373 = vadd.f32 %v353, %v311
  %v374 = vadd.f32 %v354, %v312
  %v375 = vadd.f32 %v355, %v313
  %v376 = vadd.f32 %v356, %v314
  %v377 = vadd.f32 %v357, %v315
  %v378 = vadd.f32 %v358, %v316
  %v379 = vadd.f32 %v359, %v317
  %v380 = vadd.f32 %v360, %v318
  %v381 = vadd.f32 %v361, %v319
  %v382 = vadd.f32 %v362, %v320
  %v383 = vadd.f32 %v363, %v321
  %v384 = vadd.f32 %v364, %v322
  %v385 = vadd.f32 %v365, %v323
  %v386 = vadd.f32 %v366, %v306
  %v387 = vadd.f32 %v367, %v307
  %v388 = vadd.f32 %v368, %v308
  %v389 = vadd.f32 %v369, %v309
  %v390 = vadd.f32 %v370, %v310
  %v391 = vadd.f32 %v371, %v311
  %v392 = vadd.f32 %v372, %v312
  %v393 = vadd.f32 %v373, %v313
  %v394 = vadd.f32 %v374, %v314
  %v395 = vadd.f32 %v375, %v315
  %v396 = vadd.f32 %v376, %v316
  %v397 = vadd.f32 %v377, %v317
  %v398 = vadd.f32 %v378, %v318
  %v399 = vadd.f32 %v379, %v319
  %v400 = vadd.f32 %v380, %v320
  %v401 = vadd.f32 %v381, %v321
  %v402 = vadd.f32 %v382, %v322
  %v403 = vadd.f32 %v383, %v323
  %v404 = vadd.f32 %v384, %v324
  %v405 = vadd.f32 %v385, %v325
  %v426 = vrot.slane %v386, 1
  %v427 = vrot.slane %v387, 1
  %v428 = vsel %vm128, %v426, %v427
  %v429 = vrot.slane %v388, 1
  %v430 = vrot.slane %v389, 1
  %v431 = vsel %vm128, %v429, %v430
  %v432 = vrot.slane %v390, 1
  %v433 = vrot.slane %v391, 1
  %v434 = vsel %vm128, %v432, %v433
  %v435 = vrot.slane %v392, 1
  %v436 = vrot.slane %v393, 1
  %v437 = vsel %vm128, %v435, %v436
  %v438 = vrot.slane %v394, 1
  %v439 = vrot.slane %v395, 1
  %v440 = vsel %vm128, %v438, %v439
  %v441 = vrot.slane %v396, 1
  %v442 = vrot.slane %v397, 1
  %v443 = vsel %vm128, %v441, %v442
  %v444 = vrot.slane %v398, 1
  %v445 = vrot.slane %v399, 1
  %v446 = vsel %vm128, %v444, %v445
  %v447 = vrot.slane %v400, 1
  %v448 = vrot.slane %v401, 1
  %v449 = vsel %vm128, %v447, %v448
  %v450 = vrot.slane %v402, 1
  %v451 = vrot.slane %v403, 1
  %v452 = vsel %vm128, %v450, %v451
  %v453 = vrot.slane %v404, 1
  %v454 = vrot.slane %v405, 1
  %v455 = vsel %vm128, %v453, %v454
  %v476 = vadd.f32 %v386, %v428
  %v477 = vadd.f32 %v387, %v427
  %v478 = vadd.f32 %v388, %v431
  %v479 = vadd.f32 %v389, %v430
  %v480 = vadd.f32 %v390, %v434
  %v481 = vadd.f32 %v391, %v433
  %v482 = vadd.f32 %v392, %v437
  %v483 = vadd.f32 %v393, %v436
  %v484 = vadd.f32 %v394, %v440
  %v485 = vadd.f32 %v395, %v439
  %v486 = vadd.f32 %v396, %v443
  %v487 = vadd.f32 %v397, %v442
  %v488 = vadd.f32 %v398, %v446
  %v489 = vadd.f32 %v399, %v445
  %v490 = vadd.f32 %v400, %v449
  %v491 = vadd.f32 %v401, %v448
  %v492 = vadd.f32 %v402, %v452
  %v493 = vadd.f32 %v403, %v451
  %v494 = vadd.f32 %v404, %v455
  %v495 = vadd.f32 %v405, %v454
  %v496 = vrot.slane %v386, 2
  %v497 = vrot.slane %v387, 2
  %v498 = vsel %vm227, %v496, %v497
  %v499 = vrot.slane %v388, 2
  %v500 = vrot.slane %v389, 2
  %v501 = vsel %vm227, %v499, %v500
  %v502 = vrot.slane %v390, 2
  %v503 = vrot.slane %v391, 2
  %v504 = vsel %vm227, %v502, %v503
  %v505 = vrot.slane %v392, 2
  %v506 = vrot.slane %v393, 2
  %v507 = vsel %vm227, %v505, %v506
  %v508 = vrot.slane %v394, 2
  %v509 = vrot.slane %v395, 2
  %v510 = vsel %vm227, %v508, %v509
  %v511 = vrot.slane %v396, 2
  %v512 = vrot.slane %v397, 2
  %v513 = vsel %vm227, %v511, %v512
  %v514 = vrot.slane %v398, 2
  %v515 = vrot.slane %v399, 2
  %v516 = vsel %vm227, %v514, %v515
  %v517 = vrot.slane %v400, 2
  %v518 = vrot.slane %v401, 2
  %v519 = vsel %vm227, %v517, %v518
  %v520 = vrot.slane %v402, 2
  %v521 = vrot.slane %v403, 2
  %v522 = vsel %vm227, %v520, %v521
  %v523 = vrot.slane %v404, 2
  %v524 = vrot.slane %v405, 2
  %v525 = vsel %vm227, %v523, %v524
  %v546 = vadd.f32 %v476, %v498
  %v547 = vadd.f32 %v477, %v497
  %v548 = vadd.f32 %v478, %v501
  %v549 = vadd.f32 %v479, %v500
  %v550 = vadd.f32 %v480, %v504
  %v551 = vadd.f32 %v481, %v503
  %v552 = vadd.f32 %v482, %v507
  %v553 = vadd.f32 %v483, %v506
  %v554 = vadd.f32 %v484, %v510
  %v555 = vadd.f32 %v485, %v509
  %v556 = vadd.f32 %v486, %v513
  %v557 = vadd.f32 %v487, %v512
  %v558 = vadd.f32 %v488, %v516
  %v559 = vadd.f32 %v489, %v515
  %v560 = vadd.f32 %v490, %v519
  %v561 = vadd.f32 %v491, %v518
  %v562 = vadd.f32 %v492, %v522
  %v563 = vadd.f32 %v493, %v521
  %v564 = vadd.f32 %v494, %v525
  %v565 = vadd.f32 %v495, %v524
  %vm566 = vcmask 1044480
  %v567 = vrot.slane %v386, 3
  %v568 = vrot.slane %v387, 3
  %v569 = vsel %vm566, %v567, %v568
  %v570 = vrot.slane %v388, 3
  %v571 = vrot.slane %v389, 3
  %v572 = vsel %vm566, %v570, %v571
  %v573 = vrot.slane %v390, 3
  %v574 = vrot.slane %v391, 3
  %v575 = vsel %vm566, %v573, %v574
  %v576 = vrot.slane %v392, 3
  %v577 = vrot.slane %v393, 3
  %v578 = vsel %vm566, %v576, %v577
  %v579 = vrot.slane %v394, 3
  %v580 = vrot.slane %v395, 3
  %v581 = vsel %vm566, %v579, %v580
  %v582 = vrot.slane %v396, 3
  %v583 = vrot.slane %v397, 3
  %v584 = vsel %vm566, %v582, %v583
  %v585 = vrot.slane %v398, 3
  %v586 = vrot.slane %v399, 3
  %v587 = vsel %vm566, %v585, %v586
  %v588 = vrot.slane %v400, 3
  %v589 = vrot.slane %v401, 3
  %v590 = vsel %vm566, %v588, %v589
  %v591 = vrot.slane %v402, 3
  %v592 = vrot.slane %v403, 3
  %v593 = vsel %vm566, %v591, %v592
  %v594 = vrot.slane %v404, 3
  %v595 = vrot.slane %v405, 3
  %v596 = vsel %vm566, %v594, %v595
  %v617 = vadd.f32 %v546, %v569
  %v618 = vadd.f32 %v547, %v568
  %v619 = vadd.f32 %v548, %v572
  %v620 = vadd.f32 %v549, %v571
  %v621 = vadd.f32 %v550, %v575
  %v622 = vadd.f32 %v551, %v574
  %v623 = vadd.f32 %v552, %v578
  %v624 = vadd.f32 %v553, %v577
  %v625 = vadd.f32 %v554, %v581
  %v626 = vadd.f32 %v555, %v580
  %v627 = vadd.f32 %v556, %v584
  %v628 = vadd.f32 %v557, %v583
  %v629 = vadd.f32 %v558, %v587
  %v630 = vadd.f32 %v559, %v586
  %v631 = vadd.f32 %v560, %v590
  %v632 = vadd.f32 %v561, %v589
  %v633 = vadd.f32 %v562, %v593
  %v634 = vadd.f32 %v563, %v592
  %v635 = vadd.f32 %v564, %v596
  %v636 = vadd.f32 %v565, %v595
  %vm637 = vcmask 1043456
  %v638 = vrot.slane %v386, 4
  %v639 = vrot.slane %v387, 4
  %v640 = vsel %vm637, %v638, %v639
  %v641 = vrot.slane %v388, 4
  %v642 = vrot.slane %v389, 4
  %v643 = vsel %vm637, %v641, %v642
  %v644 = vrot.slane %v390, 4
  %v645 = vrot.slane %v391, 4
  %v646 = vsel %vm637, %v644, %v645
  %v647 = vrot.slane %v392, 4
  %v648 = vrot.slane %v393, 4
  %v649 = vsel %vm637, %v647, %v648
  %v650 = vrot.slane %v394, 4
  %v651 = vrot.slane %v395, 4
  %v652 = vsel %vm637, %v650, %v651
  %v653 = vrot.slane %v396, 4
  %v654 = vrot.slane %v397, 4
  %v655 = vsel %vm637, %v653, %v654
  %v656 = vrot.slane %v398, 4
  %v657 = vrot.slane %v399, 4
  %v658 = vsel %vm637, %v656, %v657
  %v659 = vrot.slane %v400, 4
  %v660 = vrot.slane %v401, 4
  %v661 = vsel %vm637, %v659, %v660
  %v662 = vrot.slane %v402, 4
  %v663 = vrot.slane %v403, 4
  %v664 = vsel %vm637, %v662, %v663
  %v665 = vrot.slane %v404, 4
  %v666 = vrot.slane %v405, 4
  %v667 = vsel %vm637, %v665, %v666
  %v688 = vadd.f32 %v617, %v640
  %v689 = vadd.f32 %v618, %v639
  %v690 = vadd.f32 %v619, %v643
  %v691 = vadd.f32 %v620, %v642
  %v692 = vadd.f32 %v621, %v646
  %v693 = vadd.f32 %v622, %v645
  %v694 = vadd.f32 %v623, %v649
  %v695 = vadd.f32 %v624, %v648
  %v696 = vadd.f32 %v625, %v652
  %v697 = vadd.f32 %v626, %v651
  %v698 = vadd.f32 %v627, %v655
  %v699 = vadd.f32 %v628, %v654
  %v700 = vadd.f32 %v629, %v658
  %v701 = vadd.f32 %v630, %v657
  %v702 = vadd.f32 %v631, %v661
  %v703 = vadd.f32 %v632, %v660
  %v704 = vadd.f32 %v633, %v664
  %v705 = vadd.f32 %v634, %v663
  %v706 = vadd.f32 %v635, %v667
  %v707 = vadd.f32 %v636, %v666
  %s708 = sld [smem:[#allocation2]]
  %v709 = vstv %s708
  %v710 = vadd.f32 %v688, %v709
  %v711 = vadd.f32 %v689, %v709
  %v712 = vadd.f32 %v690, %v709
  %v713 = vadd.f32 %v691, %v709
  %v714 = vadd.f32 %v692, %v709
  %v715 = vadd.f32 %v693, %v709
  %v716 = vadd.f32 %v694, %v709
  %v717 = vadd.f32 %v695, %v709
  %v718 = vadd.f32 %v696, %v709
  %v719 = vadd.f32 %v697, %v709
  %v720 = vadd.f32 %v698, %v709
  %v721 = vadd.f32 %v699, %v709
  %v722 = vadd.f32 %v700, %v709
  %v723 = vadd.f32 %v701, %v709
  %v724 = vadd.f32 %v702, %v709
  %v725 = vadd.f32 %v703, %v709
  %v726 = vadd.f32 %v704, %v709
  %v727 = vadd.f32 %v705, %v709
  %v728 = vadd.f32 %v706, %v709
  %v729 = vadd.f32 %v707, %v709
  %vm730 = vcmask 15360
  %731 = vst.msk [vmem:[%s2] sm:$0xff] %vm730, %v710
  %vm732 = vcmask 9216
  %733 = vst.msk [vmem:[%s2 + $0x8] sm:$0x3] %vm732, %v711
  %734 = vst.msk [vmem:[%s2 + $0x10] sm:$0xff] %vm730, %v712
  %735 = vst.msk [vmem:[%s2 + $0x18] sm:$0x3] %vm732, %v713
  %736 = vst.msk [vmem:[%s2 + $0x20] sm:$0xff] %vm730, %v714
  %737 = vst.msk [vmem:[%s2 + $0x28] sm:$0x3] %vm732, %v715
  %738 = vst.msk [vmem:[%s2 + $0x30] sm:$0xff] %vm730, %v716
  %739 = vst.msk [vmem:[%s2 + $0x38] sm:$0x3] %vm732, %v717
  %740 = vst.msk [vmem:[%s2 + $0x40] sm:$0xff] %vm730, %v718
  %741 = vst.msk [vmem:[%s2 + $0x48] sm:$0x3] %vm732, %v719
  %742 = vst.msk [vmem:[%s2 + $0x50] sm:$0xff] %vm730, %v720
  %743 = vst.msk [vmem:[%s2 + $0x58] sm:$0x3] %vm732, %v721
  %744 = vst.msk [vmem:[%s2 + $0x60] sm:$0xff] %vm730, %v722
  %745 = vst.msk [vmem:[%s2 + $0x68] sm:$0x3] %vm732, %v723
  %746 = vst.msk [vmem:[%s2 + $0x70] sm:$0xff] %vm730, %v724
  %747 = vst.msk [vmem:[%s2 + $0x78] sm:$0x3] %vm732, %v725
  %748 = vst.msk [vmem:[%s2 + $0x80] sm:$0xff] %vm730, %v726
  %749 = vst.msk [vmem:[%s2 + $0x88] sm:$0x3] %vm732, %v727
  %750 = vst.msk [vmem:[%s2 + $0x90] sm:$0xff] %vm730, %v728
  %751 = vst.msk [vmem:[%s2 + $0x98] sm:$0x3] %vm732, %v729
  // Predicated region
  $region10: #{tpu_custom_call.1} parent=0 // pred_check
    _
  $region11: #{tpu_custom_call.1} parent=0 // pred_check_branch
    %753 = sbr.rel (0) target = $region13
  $region12: #{tpu_custom_call.1} parent=0 // pred_region
    _
  $region13: #{tpu_custom_call.1} parent=0 // pred_fallthru
    _
  // Predicated region
  $region14: #{tpu_custom_call.1} parent=0 // pred_check
    _
  $region15: #{tpu_custom_call.1} parent=0 // pred_check_branch
    %755 = sbr.rel (0) target = $region17
  $region16: #{tpu_custom_call.1} parent=0 // pred_region
    _
  $region17: #{tpu_custom_call.1} parent=0 // pred_fallthru
    _

</llo_original>
